<compile_context>
chip_gen: v6e
topology: v6e:2x2x1
jax: 0.10.0
libtpu: 0.0.40
codegen_flags: <defaults>
</compile_context>

<pallas_src>
import math

import jax
import jax.numpy as jnp
from jax.experimental import pallas as pl
from jax.experimental.pallas import tpu as pltpu

MXU_DTYPE = jnp.bfloat16
_LANE = 128          # lane alignment (last dim)
_SUBLANE = 16        # bf16-safe sublane alignment (second-to-last dim)
_MAX_TM = 512        # matmul M tile cap
_MAX_TN = 512        # matmul N tile cap
_MAX_TK = 2048       # matmul K depth cap == single-K-tile threshold
_MAX_BN = 512        # stage-1 (weight build) row-tile cap
_MAX_BK = 1024       # stage-1 col-tile cap


def _round_up(a, b):
    return ((a + b - 1) // b) * b


def _pick_tile(size, cap, align):
    """Largest multiple of `align` that divides `size` and is <= cap (>= align)."""
    best = align
    t = align
    limit = min(size, cap)
    while t <= limit:
        if size % t == 0:
            best = t
        t += align
    return best


def _pad2d(a, rows, cols):
    r, c = a.shape
    if (r, c) == (rows, cols):
        return a                     # skip the extra HBM pass when already aligned
    return jnp.pad(a, ((0, rows - r), (0, cols - c)))


def _vmem_limit(need_bytes):
    # 2x headroom, floor at 16 MiB, ceiling 48 MiB (v7x physical VMEM is 64 MiB).
    return int(min(48 * 1024 * 1024, max(2 * need_bytes, 16 * 1024 * 1024)))


def _softplus(rho):
    # Numerically safe softplus: avoids exp overflow for large rho.
    return jnp.where(rho > 20.0, rho, jnp.log1p(jnp.exp(jnp.minimum(rho, 20.0))))


# ---------------------------------------------------------------------------
# Stage 1 (two-stage path): W^T = (mean + softplus(rho) * eps)^T, built once.
# ---------------------------------------------------------------------------
def _weight_t_kernel(mean_ref, rho_ref, eps_ref, wt_ref):
    w = mean_ref[...] + _softplus(rho_ref[...]) * eps_ref[...]   # [bn, bk] f32 (VPU/EUP)
    # Transpose here (mem-bound pass, XLU idle) so stage 2 needs no per-step transpose.
    wt_ref[...] = w.T.astype(wt_ref.dtype)                        # [bk, bn] bf16


# ---------------------------------------------------------------------------
# Stage 2 (two-stage path): y = x @ W^T.
# ---------------------------------------------------------------------------
def _matmul_kernel(x_ref, wt_ref, o_ref):
    # Single K tile: no accumulator, direct lane-dense store.
    o_ref[...] = jnp.dot(
        x_ref[...].astype(wt_ref.dtype), wt_ref[...],
        preferred_element_type=jnp.float32).astype(o_ref.dtype)


def _matmul_acc_kernel(x_ref, wt_ref, o_ref, acc_ref):
    @pl.when(pl.program_id(2) == 0)
    def _init():
        acc_ref[...] = jnp.zeros_like(acc_ref)

    acc_ref[...] += jnp.dot(
        x_ref[...].astype(wt_ref.dtype), wt_ref[...],
        preferred_element_type=jnp.float32)

    @pl.when(pl.program_id(2) == pl.num_programs(2) - 1)
    def _store():
        o_ref[...] = acc_ref[...].astype(o_ref.dtype)


# ---------------------------------------------------------------------------
# Fused path (single M tile): build W inside the matmul kernel.
# ---------------------------------------------------------------------------
def _fused_kernel(x_ref, mean_ref, rho_ref, eps_ref, o_ref):
    w = (mean_ref[...] + _softplus(rho_ref[...]) * eps_ref[...]).astype(MXU_DTYPE)
    o_ref[...] = jax.lax.dot_general(
        x_ref[...].astype(MXU_DTYPE), w,
        dimension_numbers=(((1,), (1,)), ((), ())),
        preferred_element_type=jnp.float32).astype(o_ref.dtype)


def _fused_acc_kernel(x_ref, mean_ref, rho_ref, eps_ref, o_ref, acc_ref):
    @pl.when(pl.program_id(1) == 0)
    def _init():
        acc_ref[...] = jnp.zeros_like(acc_ref)

    w = (mean_ref[...] + _softplus(rho_ref[...]) * eps_ref[...]).astype(MXU_DTYPE)
    acc_ref[...] += jax.lax.dot_general(
        x_ref[...].astype(MXU_DTYPE), w,
        dimension_numbers=(((1,), (1,)), ((), ())),
        preferred_element_type=jnp.float32)

    @pl.when(pl.program_id(1) == pl.num_programs(1) - 1)
    def _store():
        o_ref[...] = acc_ref[...].astype(o_ref.dtype)


# ---------------------------------------------------------------------------
# Wrapper
# ---------------------------------------------------------------------------
def bayesian_linear(x, mean, rho, eps):
    """x: [..., in_features]; mean/rho/eps: [out_features, in_features] (f32)."""
    orig_shape = x.shape
    K = orig_shape[-1]
    N = mean.shape[0]
    x2d = x.reshape(-1, K)
    M = x2d.shape[0]

    # Pad only to the layout minimum (no tile-size round-up).
    Mp = _round_up(M, _SUBLANE)
    Np = _round_up(N, _LANE)
    Kp = _round_up(K, _LANE)

    x_p = _pad2d(x2d, Mp, Kp)
    mean_p = _pad2d(mean, Np, Kp)
    rho_p = _pad2d(rho, Np, Kp)
    eps_p = _pad2d(eps, Np, Kp)
    # NOTE: eps could alternatively be generated on-chip with pltpu.prng_* (saves a full
    # 4 B/elem HBM read), but the RNG stream would differ from PyTorch; kept host-side.

    # Matmul tiles: divisors of the (minimally padded) sizes.
    tm = _pick_tile(Mp, _MAX_TM, _SUBLANE)
    tn = _pick_tile(Np, _MAX_TN, _LANE)
    single_k = Kp <= _MAX_TK
    tk = Kp if single_k else _pick_tile(Kp, _MAX_TK, _LANE)
    fused = (Mp // tm) == 1            # whole M fits in one tile -> skip stage 1

    # v7x has 2 TensorCores: keep >= 2 steps on a "parallel" axis when possible.
    if fused and (Np // tn) < 2 and Np >= 2 * _LANE:
        tn = _pick_tile(Np, Np // 2, _LANE)

    out_dtype = x.dtype
    out_shape = jax.ShapeDtypeStruct((Mp, Np), out_dtype)

    if fused:
        if single_k:
            need = 2 * (Mp * Kp * 4 + 3 * tn * Kp * 4 + Mp * tn * 4)
            out_p = pl.pallas_call(
                _fused_kernel,
                out_shape=out_shape,
                grid=(Np // tn,),
                in_specs=[
                    pl.BlockSpec((Mp, Kp), lambda j: (0, 0)),
                    pl.BlockSpec((tn, Kp), lambda j: (j, 0)),
                    pl.BlockSpec((tn, Kp), lambda j: (j, 0)),
                    pl.BlockSpec((tn, Kp), lambda j: (j, 0)),
                ],
                out_specs=pl.BlockSpec((Mp, tn), lambda j: (0, j)),
                compiler_params=pltpu.CompilerParams(
                    dimension_semantics=("parallel",),
                    vmem_limit_bytes=_vmem_limit(need)),
            )(x_p, mean_p, rho_p, eps_p)
        else:
            need = 2 * (Mp * tk * 4 + 3 * tn * tk * 4 + Mp * tn * 4) + Mp * tn * 4
            out_p = pl.pallas_call(
                _fused_acc_kernel,
                out_shape=out_shape,
                grid_spec=pltpu.PrefetchScalarGridSpec(
                    num_scalar_prefetch=0,
                    grid=(Np // tn, Kp // tk),
                    in_specs=[
                        pl.BlockSpec((Mp, tk), lambda j, k: (0, k)),
                        pl.BlockSpec((tn, tk), lambda j, k: (j, k)),
                        pl.BlockSpec((tn, tk), lambda j, k: (j, k)),
                        pl.BlockSpec((tn, tk), lambda j, k: (j, k)),
                    ],
                    out_specs=pl.BlockSpec((Mp, tn), lambda j, k: (0, j)),
                    scratch_shapes=[pltpu.VMEM((Mp, tn), jnp.float32)],
                ),
                compiler_params=pltpu.CompilerParams(
                    dimension_semantics=("parallel", "arbitrary"),
                    vmem_limit_bytes=_vmem_limit(need)),
            )(x_p, mean_p, rho_p, eps_p)
    else:
        # Stage 1: build W^T exactly once (mem-bound elementwise + transpose, bf16 out).
        bn = _pick_tile(Np, _MAX_BN, _LANE)
        bk = _pick_tile(Kp, _MAX_BK, _LANE)
        need1 = 2 * (3 * bn * bk * 4 + bk * bn * 2)
        w_t = pl.pallas_call(
            _weight_t_kernel,
            out_shape=jax.ShapeDtypeStruct((Kp, Np), MXU_DTYPE),
            grid=(Np // bn, Kp // bk),
            in_specs=[
                pl.BlockSpec((bn, bk), lambda j, k: (j, k)),
                pl.BlockSpec((bn, bk), lambda j, k: (j, k)),
                pl.BlockSpec((bn, bk), lambda j, k: (j, k)),
            ],
            out_specs=pl.BlockSpec((bk, bn), lambda j, k: (k, j)),
            compiler_params=pltpu.CompilerParams(
                dimension_semantics=("parallel", "parallel"),
                vmem_limit_bytes=_vmem_limit(need1)),
        )(mean_p, rho_p, eps_p)

        # Stage 2: tiled y = x @ W^T with canonical [tm,tk] x [tk,tn] contraction.
        if single_k:
            need = 2 * (tm * Kp * 4 + Kp * tn * 2 + tm * tn * 4)
            out_p = pl.pallas_call(
                _matmul_kernel,
                out_shape=out_shape,
                grid=(Mp // tm, Np // tn),
                in_specs=[
                    pl.BlockSpec((tm, Kp), lambda i, j: (i, 0)),
                    pl.BlockSpec((Kp, tn), lambda i, j: (0, j)),
                ],
                out_specs=pl.BlockSpec((tm, tn), lambda i, j: (i, j)),
                compiler_params=pltpu.CompilerParams(
                    dimension_semantics=("parallel", "parallel"),
                    vmem_limit_bytes=_vmem_limit(need)),
            )(x_p, w_t)
        else:
            need = 2 * (tm * tk * 4 + tk * tn * 2 + tm * tn * 4) + tm * tn * 4
            out_p = pl.pallas_call(
                _matmul_acc_kernel,
                out_shape=out_shape,
                grid_spec=pltpu.PrefetchScalarGridSpec(
                    num_scalar_prefetch=0,
                    grid=(Mp // tm, Np // tn, Kp // tk),
                    in_specs=[
                        pl.BlockSpec((tm, tk), lambda i, j, k: (i, k)),
                        pl.BlockSpec((tk, tn), lambda i, j, k: (k, j)),
                    ],
                    out_specs=pl.BlockSpec((tm, tn), lambda i, j, k: (i, j)),
                    scratch_shapes=[pltpu.VMEM((tm, tn), jnp.float32)],
                ),
                compiler_params=pltpu.CompilerParams(
                    dimension_semantics=("parallel", "parallel", "arbitrary"),
                    vmem_limit_bytes=_vmem_limit(need)),
            )(x_p, w_t)

    out = out_p if (Mp, Np) == (M, N) else out_p[:M, :N]
    return out.reshape(*orig_shape[:-1], N)


def init_params(key, in_features, out_features):
    """Deterministic init matching BayesianLinear.__init__/reset_parameters + eps draw."""
    k_mean, k_eps = jax.random.split(key)
    bound = 1.0 / math.sqrt(in_features)      # kaiming_uniform_(a=sqrt(5)) on [out, in]
    mean = jax.random.uniform(
        k_mean, (out_features, in_features), jnp.float32, minval=-bound, maxval=bound)
    rho = jnp.full((out_features, in_features), -5.0, jnp.float32)
    eps = jax.random.normal(k_eps, (out_features, in_features), jnp.float32)
    return mean, rho, eps


if __name__ == "__main__":
    def check(batch, seq, in_features, out_features, key):
        k_x, k_p = jax.random.split(key)
        x = jax.random.normal(k_x, (batch, seq, in_features), jnp.float32)
        mean, rho, eps = init_params(k_p, in_features, out_features)

        y = jax.block_until_ready(bayesian_linear(x, mean, rho, eps))
        assert y.shape == (batch, seq, out_features)

        # Reference with the same bf16-input / f32-accumulate MXU precision.
        w = mean + jnp.log1p(jnp.exp(rho)) * eps
        y_ref = jnp.einsum(
            "bsk,nk->bsn",
            x.astype(jnp.bfloat16).astype(jnp.float32),
            w.astype(jnp.bfloat16).astype(jnp.float32))
        err = float(jnp.max(jnp.abs(y - y_ref)))
        assert jnp.allclose(y, y_ref, atol=2e-2, rtol=2e-2), err

    keys = jax.random.split(jax.random.PRNGKey(0), 4)
    # Fused path, single K tile (primary small demo shapes).
    check(batch=2, seq=8, in_features=32, out_features=64, key=keys[0])
    # Fused path, multi-K accumulator (K > 2048).
    check(batch=2, seq=8, in_features=2304, out_features=256, key=keys[1])
    # Two-stage path (M > 512), single K tile, unaligned N/K (exercises padding).
    check(batch=3, seq=352, in_features=200, out_features=320, key=keys[2])
    # Two-stage path, multi-K accumulator.
    check(batch=2, seq=512, in_features=2304, out_features=256, key=keys[3])

    print("KERNEL_OK")
</pallas_src>

<mosaic_0001>
module attributes {stable_mosaic.version = 11 : i64} {
  func.func @_fused_kernel(%arg0: i32, %arg1: memref<16x128xf32, #tpu.memory_space<vmem>>, %arg2: memref<128x128xf32, #tpu.memory_space<vmem>>, %arg3: memref<128x128xf32, #tpu.memory_space<vmem>>, %arg4: memref<128x128xf32, #tpu.memory_space<vmem>>, %arg5: memref<16x128xf32, #tpu.memory_space<vmem>>) attributes {dimension_semantics = [#tpu.dimension_semantics<parallel>], iteration_bounds = array<i64: 1>, scalar_prefetch = 0 : i64, scratch_operands = 0 : i64, tpu.core_type = #tpu.core_type<tc>, window_params = [{pipeline_mode = #tpu.pipeline_mode<synchronous>, transform_indices = @transform_0, window_bounds = array<i64: 16, 128>}, {transform_indices = @transform_1, window_bounds = array<i64: 128, 128>}, {transform_indices = @transform_2, window_bounds = array<i64: 128, 128>}, {transform_indices = @transform_3, window_bounds = array<i64: 128, 128>}, {transform_indices = @transform_4, window_bounds = array<i64: 16, 128>}]} {
    %c0 = arith.constant 0 : index
    %c0_0 = arith.constant 0 : index
    %0 = vector.load %arg2[%c0, %c0_0] : memref<128x128xf32, #tpu.memory_space<vmem>>, vector<128x128xf32>
    %c0_1 = arith.constant 0 : index
    %c0_2 = arith.constant 0 : index
    %1 = vector.load %arg3[%c0_1, %c0_2] : memref<128x128xf32, #tpu.memory_space<vmem>>, vector<128x128xf32>
    %cst = arith.constant 2.000000e+01 : f32
    %2 = vector.broadcast %cst : f32 to vector<128x128xf32>
    %3 = arith.cmpf ogt, %1, %2 : vector<128x128xf32>
    %cst_3 = arith.constant 2.000000e+01 : f32
    %4 = vector.broadcast %cst_3 : f32 to vector<128x128xf32>
    %5 = arith.minimumf %1, %4 : vector<128x128xf32>
    %6 = math.exp %5 : vector<128x128xf32>
    %7 = math.log1p %6 : vector<128x128xf32>
    %8 = arith.select %3, %1, %7 : vector<128x128xi1>, vector<128x128xf32>
    %c0_4 = arith.constant 0 : index
    %c0_5 = arith.constant 0 : index
    %9 = vector.load %arg4[%c0_4, %c0_5] : memref<128x128xf32, #tpu.memory_space<vmem>>, vector<128x128xf32>
    %10 = arith.mulf %8, %9 : vector<128x128xf32>
    %11 = arith.addf %0, %10 : vector<128x128xf32>
    %12 = arith.truncf %11 : vector<128x128xf32> to vector<128x128xbf16>
    %c0_6 = arith.constant 0 : index
    %c0_7 = arith.constant 0 : index
    %13 = vector.load %arg1[%c0_6, %c0_7] : memref<16x128xf32, #tpu.memory_space<vmem>>, vector<16x128xf32>
    %14 = arith.truncf %13 : vector<16x128xf32> to vector<16x128xbf16>
    %cst_8 = arith.constant dense<0.000000e+00> : vector<16x128xf32>
    %15 = tpu.matmul %14, %12, %cst_8 {dimension_numbers = #tpu.dot_dimension_numbers<[1], [1], [0], [0], [0, 0, 1, 0], [], []>} : vector<16x128xbf16>, vector<128x128xbf16>, vector<16x128xf32> -> vector<16x128xf32>
    %c0_9 = arith.constant 0 : index
    %c0_10 = arith.constant 0 : index
    %16 = vector.load %arg5[%c0_9, %c0_10] : memref<16x128xf32, #tpu.memory_space<vmem>>, vector<16x128xf32>
    tpu.vector_store %arg5[%c0_9, %c0_10], %15 {strides = array<i32>} : memref<16x128xf32, #tpu.memory_space<vmem>>, vector<16x128xf32>,
    return
  }
  func.func @transform_0(%arg0: i32) -> (i32, i32) {
    %c0_i32 = arith.constant 0 : i32
    %c0_i32_0 = arith.constant 0 : i32
    %c0_i32_1 = arith.constant 0 : i32
    return %c0_i32, %c0_i32_0 : i32, i32
  }
  func.func @transform_1(%arg0: i32) -> (i32, i32) {
    %c0_i32 = arith.constant 0 : i32
    %c0_i32_0 = arith.constant 0 : i32
    return %arg0, %c0_i32 : i32, i32
  }
  func.func @transform_2(%arg0: i32) -> (i32, i32) {
    %c0_i32 = arith.constant 0 : i32
    %c0_i32_0 = arith.constant 0 : i32
    return %arg0, %c0_i32 : i32, i32
  }
  func.func @transform_3(%arg0: i32) -> (i32, i32) {
    %c0_i32 = arith.constant 0 : i32
    %c0_i32_0 = arith.constant 0 : i32
    return %arg0, %c0_i32 : i32, i32
  }
  func.func @transform_4(%arg0: i32) -> (i32, i32) {
    %c0_i32 = arith.constant 0 : i32
    %c0_i32_0 = arith.constant 0 : i32
    return %c0_i32, %arg0 : i32, i32
  }
}

</mosaic_0001>

<llo_original>
// kernel: tpu_custom_call.1
$region0: #{tpu_custom_call.1}
  #allocation0 [shape = 'u32[]', space=smem, size = 0x4, offset = 0x4, fixed_abs, tag = 'smem constant byte address 0x4 - core index']
  #allocation1 [shape = 'u32[144,128]{1,0:T(1,128)}', space=vmem, size = 0x12000, scoped, tag = 'internal scratch']
  %s0 = inlined_call_operand.hbm [shape: f32[16,128], index: 0, kind: input, shape index: {}]
  %s1 = inlined_call_operand.hbm [shape: f32[128,128], index: 1, kind: input, shape index: {}]
  %s2 = inlined_call_operand.hbm [shape: f32[128,128], index: 2, kind: input, shape index: {}]
  %s3 = inlined_call_operand.hbm [shape: f32[128,128], index: 3, kind: input, shape index: {}]
  %s4 = inlined_call_operand.hbm [shape: f32[16,128], index: 4, kind: output, shape index: {}]
  %s5 = sld [smem:[#allocation0]]
  $region42: #{tpu_custom_call.1} parent=0
    _
  %s7 = ssub.s32 1, %s5
  %s8 = scalar_select 0, %s7, %s5
  $region1: #{tpu_custom_call.1} parent=0
    #allocation2 [shape = 'u8[8192]{0}', space=vmem, size = 0x2000, scoped, tag = 'input window, operand 0, single buffered']
    #allocation3 [shape = 's32[1]{0}', space=sflag, size = 0x4, scoped, tag = 'scoped memory for tpu_custom_call.1']
    #allocation4 [shape = 's32[1]{0}', space=sflag, size = 0x4, scoped, tag = 'scoped memory for tpu_custom_call.1']
    #allocation5 [shape = 'u8[65536]{0}', space=vmem, size = 0x10000, scoped, tag = 'input window, operand 1, single buffered']
    #allocation6 [shape = 's32[1]{0}', space=sflag, size = 0x4, scoped, tag = 'scoped memory for tpu_custom_call.1']
    #allocation7 [shape = 'u8[65536]{0}', space=vmem, size = 0x10000, scoped, tag = 'input window, operand 2, single buffered']
    #allocation8 [shape = 'u8[65536]{0}', space=vmem, size = 0x10000, scoped, tag = 'input window, operand 3, single buffered']
    #allocation9 [shape = 's32[1]{0}', space=sflag, size = 0x4, scoped, tag = 'scoped memory for tpu_custom_call.1']
    #allocation10 [shape = 'u8[8192]{0}', space=vmem, size = 0x2000, scoped, tag = 'output window, operand 0, single buffered']
    %9 = vsyncpa [#allocation3], 0
    %10 = vsyncpa [#allocation6], 0
    %11 = vsyncpa [#allocation9], 0
    %12 = vsyncpa [#allocation4], 0
    // Predicated region
    $region2: #{tpu_custom_call.1} parent=1 // pred_check
      _
    $region3: #{tpu_custom_call.1} parent=1 // pred_check_branch
      %14 = sbr.rel (0) target = $region5
    $region4: #{tpu_custom_call.1} parent=1 // pred_region
      %s16 = ssub.s32 256, 256
      %17 = vsyncadd [#allocation3], %s16
      %s18 = sshll.u32 [#allocation2], 4
      %s19 = int_to_ptr.vmem [resolvable:$true] %s18
      %24 = dma.hbm_to_vmem [thread:$0]  %s0, 256, %s19, [#allocation3], 128, 128, 8
    $region5: #{tpu_custom_call.1} parent=1 // pred_fallthru
      _
    // Predicated region
    $region6: #{tpu_custom_call.1} parent=1 // pred_check
      _
    $region7: #{tpu_custom_call.1} parent=1 // pred_check_branch
      %26 = sbr.rel (0) target = $region9
    $region8: #{tpu_custom_call.1} parent=1 // pred_region
      %s28 = ssub.s32 2048, 2048
      %29 = vsyncadd [#allocation6], %s28
      %s30 = sshll.u32 [#allocation5], 4
      %s31 = int_to_ptr.vmem [resolvable:$true] %s30
      %36 = dma.hbm_to_vmem [thread:$0]  %s1, 2048, %s31, [#allocation6], 128, 128, 8
    $region9: #{tpu_custom_call.1} parent=1 // pred_fallthru
      _
    // Predicated region
    $region10: #{tpu_custom_call.1} parent=1 // pred_check
      _
    $region11: #{tpu_custom_call.1} parent=1 // pred_check_branch
      %38 = sbr.rel (0) target = $region13
    $region12: #{tpu_custom_call.1} parent=1 // pred_region
      %s40 = ssub.s32 2048, 2048
      %41 = vsyncadd [#allocation6], %s40
      %s42 = sshll.u32 [#allocation7], 4
      %s43 = int_to_ptr.vmem [resolvable:$true] %s42
      %48 = dma.hbm_to_vmem [thread:$0]  %s2, 2048, %s43, [#allocation6], 128, 128, 8
    $region13: #{tpu_custom_call.1} parent=1 // pred_fallthru
      _
    // Predicated region
    $region14: #{tpu_custom_call.1} parent=1 // pred_check
      _
    $region15: #{tpu_custom_call.1} parent=1 // pred_check_branch
      %50 = sbr.rel (0) target = $region17
    $region16: #{tpu_custom_call.1} parent=1 // pred_region
      %s52 = ssub.s32 2048, 2048
      %53 = vsyncadd [#allocation9], %s52
      %s54 = sshll.u32 [#allocation8], 4
      %s55 = int_to_ptr.vmem [resolvable:$true] %s54
      %60 = dma.hbm_to_vmem [thread:$0]  %s3, 2048, %s55, [#allocation9], 128, 128, 8
    $region17: #{tpu_custom_call.1} parent=1 // pred_fallthru
      _
    // Predicated region
    $region18: #{tpu_custom_call.1} parent=1 // pred_check
      _
    $region19: #{tpu_custom_call.1} parent=1 // pred_check_branch
      %62 = sbr.rel (0) target = $region21
    $region20: #{tpu_custom_call.1} parent=1 // pred_region
      %63 = dma.done [#allocation3], 256
    $region21: #{tpu_custom_call.1} parent=1 // pred_fallthru
      _
    // Predicated region
    $region22: #{tpu_custom_call.1} parent=1 // pred_check
      _
    $region23: #{tpu_custom_call.1} parent=1 // pred_check_branch
      %65 = sbr.rel (0) target = $region25
    $region24: #{tpu_custom_call.1} parent=1 // pred_region
      %66 = dma.done [#allocation6], 2048
    $region25: #{tpu_custom_call.1} parent=1 // pred_fallthru
      _
    // Predicated region
    $region26: #{tpu_custom_call.1} parent=1 // pred_check
      _
    $region27: #{tpu_custom_call.1} parent=1 // pred_check_branch
      %68 = sbr.rel (0) target = $region29
    $region28: #{tpu_custom_call.1} parent=1 // pred_region
      %69 = dma.done [#allocation6], 2048
    $region29: #{tpu_custom_call.1} parent=1 // pred_fallthru
      _
    // Predicated region
    $region30: #{tpu_custom_call.1} parent=1 // pred_check
      _
    $region31: #{tpu_custom_call.1} parent=1 // pred_check_branch
      %71 = sbr.rel (0) target = $region33
    $region32: #{tpu_custom_call.1} parent=1 // pred_region
      %72 = dma.done [#allocation9], 2048
    $region33: #{tpu_custom_call.1} parent=1 // pred_fallthru
      _
    %v74 = vld [vmem:[#allocation5] sm:$0xff]
    %v75 = vld [vmem:[#allocation5 + $0x8] sm:$0xff]
    %v76 = vld [vmem:[#allocation5 + $0x10] sm:$0xff]
    %v77 = vld [vmem:[#allocation5 + $0x18] sm:$0xff]
    %v78 = vld [vmem:[#allocation5 + $0x20] sm:$0xff]
    %v79 = vld [vmem:[#allocation5 + $0x28] sm:$0xff]
    %v80 = vld [vmem:[#allocation5 + $0x30] sm:$0xff]
    %v81 = vld [vmem:[#allocation5 + $0x38] sm:$0xff]
    %v82 = vld [vmem:[#allocation5 + $0x40] sm:$0xff]
    %v83 = vld [vmem:[#allocation5 + $0x48] sm:$0xff]
    %v84 = vld [vmem:[#allocation5 + $0x50] sm:$0xff]
    %v85 = vld [vmem:[#allocation5 + $0x58] sm:$0xff]
    %v86 = vld [vmem:[#allocation5 + $0x60] sm:$0xff]
    %v87 = vld [vmem:[#allocation5 + $0x68] sm:$0xff]
    %v88 = vld [vmem:[#allocation5 + $0x70] sm:$0xff]
    %v89 = vld [vmem:[#allocation5 + $0x78] sm:$0xff]
    %v90 = vld [vmem:[#allocation7] sm:$0xff]
    %v91 = vld [vmem:[#allocation7 + $0x8] sm:$0xff]
    %v92 = vld [vmem:[#allocation7 + $0x10] sm:$0xff]
    %v93 = vld [vmem:[#allocation7 + $0x18] sm:$0xff]
    %v94 = vld [vmem:[#allocation7 + $0x20] sm:$0xff]
    %v95 = vld [vmem:[#allocation7 + $0x28] sm:$0xff]
    %v96 = vld [vmem:[#allocation7 + $0x30] sm:$0xff]
    %v97 = vld [vmem:[#allocation7 + $0x38] sm:$0xff]
    %v98 = vld [vmem:[#allocation7 + $0x40] sm:$0xff]
    %v99 = vld [vmem:[#allocation7 + $0x48] sm:$0xff]
    %v100 = vld [vmem:[#allocation7 + $0x50] sm:$0xff]
    %v101 = vld [vmem:[#allocation7 + $0x58] sm:$0xff]
    %v102 = vld [vmem:[#allocation7 + $0x60] sm:$0xff]
    %v103 = vld [vmem:[#allocation7 + $0x68] sm:$0xff]
    %v104 = vld [vmem:[#allocation7 + $0x70] sm:$0xff]
    %v105 = vld [vmem:[#allocation7 + $0x78] sm:$0xff]
    %vm106 = vcmp.gt.f32.partialorder %v90, 20.0
    %vm107 = vcmp.gt.f32.partialorder %v91, 20.0
    %vm108 = vcmp.gt.f32.partialorder %v92, 20.0
    %vm109 = vcmp.gt.f32.partialorder %v93, 20.0
    %vm110 = vcmp.gt.f32.partialorder %v94, 20.0
    %vm111 = vcmp.gt.f32.partialorder %v95, 20.0
    %vm112 = vcmp.gt.f32.partialorder %v96, 20.0
    %vm113 = vcmp.gt.f32.partialorder %v97, 20.0
    %vm114 = vcmp.gt.f32.partialorder %v98, 20.0
    %vm115 = vcmp.gt.f32.partialorder %v99, 20.0
    %vm116 = vcmp.gt.f32.partialorder %v100, 20.0
    %vm117 = vcmp.gt.f32.partialorder %v101, 20.0
    %vm118 = vcmp.gt.f32.partialorder %v102, 20.0
    %vm119 = vcmp.gt.f32.partialorder %v103, 20.0
    %vm120 = vcmp.gt.f32.partialorder %v104, 20.0
    %vm121 = vcmp.gt.f32.partialorder %v105, 20.0
    %v122 = vmin.f32 %v90, 20.0
    %v123 = vmin.f32 %v91, 20.0
    %v124 = vmin.f32 %v92, 20.0
    %v125 = vmin.f32 %v93, 20.0
    %v126 = vmin.f32 %v94, 20.0
    %v127 = vmin.f32 %v95, 20.0
    %v128 = vmin.f32 %v96, 20.0
    %v129 = vmin.f32 %v97, 20.0
    %v130 = vmin.f32 %v98, 20.0
    %v131 = vmin.f32 %v99, 20.0
    %v132 = vmin.f32 %v100, 20.0
    %v133 = vmin.f32 %v101, 20.0
    %v134 = vmin.f32 %v102, 20.0
    %v135 = vmin.f32 %v103, 20.0
    %v136 = vmin.f32 %v104, 20.0
    %v137 = vmin.f32 %v105, 20.0
    %v138 = vmul.f32 %v122, 1.442695
    %v139 = vpow.pop %v138
    %v140 = vmul.f32 %v123, 1.442695
    %v141 = vpow.pop %v140
    %v142 = vmul.f32 %v124, 1.442695
    %v143 = vpow.pop %v142
    %v144 = vmul.f32 %v125, 1.442695
    %v145 = vpow.pop %v144
    %v146 = vmul.f32 %v126, 1.442695
    %v147 = vpow.pop %v146
    %v148 = vmul.f32 %v127, 1.442695
    %v149 = vpow.pop %v148
    %v150 = vmul.f32 %v128, 1.442695
    %v151 = vpow.pop %v150
    %v152 = vmul.f32 %v129, 1.442695
    %v153 = vpow.pop %v152
    %v154 = vmul.f32 %v130, 1.442695
    %v155 = vpow.pop %v154
    %v156 = vmul.f32 %v131, 1.442695
    %v157 = vpow.pop %v156
    %v158 = vmul.f32 %v132, 1.442695
    %v159 = vpow.pop %v158
    %v160 = vmul.f32 %v133, 1.442695
    %v161 = vpow.pop %v160
    %v162 = vmul.f32 %v134, 1.442695
    %v163 = vpow.pop %v162
    %v164 = vmul.f32 %v135, 1.442695
    %v165 = vpow.pop %v164
    %v166 = vmul.f32 %v136, 1.442695
    %v167 = vpow.pop %v166
    %v168 = vmul.f32 %v137, 1.442695
    %v169 = vpow.pop %v168
    %v170 = vadd.f32 %v139, 1.0
    %v171 = vlog2.pop %v170
    %v172 = vmul.f32 %v171, 0.6931472
    %v173 = vmul.f32 -0.5, %v139
    %v174 = vadd.f32 %v173, 1.0
    %v175 = vmul.f32 %v174, %v139
    %v176 = vand.u32 2147483647, %v139
    %vm177 = vcmp.lt.f32.partialorder %v176, 0.0004427343
    %v178 = vsel %vm177, %v175, %v172
    %v179 = vadd.f32 %v141, 1.0
    %v180 = vlog2.pop %v179
    %v181 = vmul.f32 %v180, 0.6931472
    %v182 = vmul.f32 -0.5, %v141
    %v183 = vadd.f32 %v182, 1.0
    %v184 = vmul.f32 %v183, %v141
    %v185 = vand.u32 2147483647, %v141
    %vm186 = vcmp.lt.f32.partialorder %v185, 0.0004427343
    %v187 = vsel %vm186, %v184, %v181
    %v188 = vadd.f32 %v143, 1.0
    %v189 = vlog2.pop %v188
    %v190 = vmul.f32 %v189, 0.6931472
    %v191 = vmul.f32 -0.5, %v143
    %v192 = vadd.f32 %v191, 1.0
    %v193 = vmul.f32 %v192, %v143
    %v194 = vand.u32 2147483647, %v143
    %vm195 = vcmp.lt.f32.partialorder %v194, 0.0004427343
    %v196 = vsel %vm195, %v193, %v190
    %v197 = vadd.f32 %v145, 1.0
    %v198 = vlog2.pop %v197
    %v199 = vmul.f32 %v198, 0.6931472
    %v200 = vmul.f32 -0.5, %v145
    %v201 = vadd.f32 %v200, 1.0
    %v202 = vmul.f32 %v201, %v145
    %v203 = vand.u32 2147483647, %v145
    %vm204 = vcmp.lt.f32.partialorder %v203, 0.0004427343
    %v205 = vsel %vm204, %v202, %v199
    %v206 = vadd.f32 %v147, 1.0
    %v207 = vlog2.pop %v206
    %v208 = vmul.f32 %v207, 0.6931472
    %v209 = vmul.f32 -0.5, %v147
    %v210 = vadd.f32 %v209, 1.0
    %v211 = vmul.f32 %v210, %v147
    %v212 = vand.u32 2147483647, %v147
    %vm213 = vcmp.lt.f32.partialorder %v212, 0.0004427343
    %v214 = vsel %vm213, %v211, %v208
    %v215 = vadd.f32 %v149, 1.0
    %v216 = vlog2.pop %v215
    %v217 = vmul.f32 %v216, 0.6931472
    %v218 = vmul.f32 -0.5, %v149
    %v219 = vadd.f32 %v218, 1.0
    %v220 = vmul.f32 %v219, %v149
    %v221 = vand.u32 2147483647, %v149
    %vm222 = vcmp.lt.f32.partialorder %v221, 0.0004427343
    %v223 = vsel %vm222, %v220, %v217
    %v224 = vadd.f32 %v151, 1.0
    %v225 = vlog2.pop %v224
    %v226 = vmul.f32 %v225, 0.6931472
    %v227 = vmul.f32 -0.5, %v151
    %v228 = vadd.f32 %v227, 1.0
    %v229 = vmul.f32 %v228, %v151
    %v230 = vand.u32 2147483647, %v151
    %vm231 = vcmp.lt.f32.partialorder %v230, 0.0004427343
    %v232 = vsel %vm231, %v229, %v226
    %v233 = vadd.f32 %v153, 1.0
    %v234 = vlog2.pop %v233
    %v235 = vmul.f32 %v234, 0.6931472
    %v236 = vmul.f32 -0.5, %v153
    %v237 = vadd.f32 %v236, 1.0
    %v238 = vmul.f32 %v237, %v153
    %v239 = vand.u32 2147483647, %v153
    %vm240 = vcmp.lt.f32.partialorder %v239, 0.0004427343
    %v241 = vsel %vm240, %v238, %v235
    %v242 = vadd.f32 %v155, 1.0
    %v243 = vlog2.pop %v242
    %v244 = vmul.f32 %v243, 0.6931472
    %v245 = vmul.f32 -0.5, %v155
    %v246 = vadd.f32 %v245, 1.0
    %v247 = vmul.f32 %v246, %v155
    %v248 = vand.u32 2147483647, %v155
    %vm249 = vcmp.lt.f32.partialorder %v248, 0.0004427343
    %v250 = vsel %vm249, %v247, %v244
    %v251 = vadd.f32 %v157, 1.0
    %v252 = vlog2.pop %v251
    %v253 = vmul.f32 %v252, 0.6931472
    %v254 = vmul.f32 -0.5, %v157
    %v255 = vadd.f32 %v254, 1.0
    %v256 = vmul.f32 %v255, %v157
    %v257 = vand.u32 2147483647, %v157
    %vm258 = vcmp.lt.f32.partialorder %v257, 0.0004427343
    %v259 = vsel %vm258, %v256, %v253
    %v260 = vadd.f32 %v159, 1.0
    %v261 = vlog2.pop %v260
    %v262 = vmul.f32 %v261, 0.6931472
    %v263 = vmul.f32 -0.5, %v159
    %v264 = vadd.f32 %v263, 1.0
    %v265 = vmul.f32 %v264, %v159
    %v266 = vand.u32 2147483647, %v159
    %vm267 = vcmp.lt.f32.partialorder %v266, 0.0004427343
    %v268 = vsel %vm267, %v265, %v262
    %v269 = vadd.f32 %v161, 1.0
    %v270 = vlog2.pop %v269
    %v271 = vmul.f32 %v270, 0.6931472
    %v272 = vmul.f32 -0.5, %v161
    %v273 = vadd.f32 %v272, 1.0
    %v274 = vmul.f32 %v273, %v161
    %v275 = vand.u32 2147483647, %v161
    %vm276 = vcmp.lt.f32.partialorder %v275, 0.0004427343
    %v277 = vsel %vm276, %v274, %v271
    %v278 = vadd.f32 %v163, 1.0
    %v279 = vlog2.pop %v278
    %v280 = vmul.f32 %v279, 0.6931472
    %v281 = vmul.f32 -0.5, %v163
    %v282 = vadd.f32 %v281, 1.0
    %v283 = vmul.f32 %v282, %v163
    %v284 = vand.u32 2147483647, %v163
    %vm285 = vcmp.lt.f32.partialorder %v284, 0.0004427343
    %v286 = vsel %vm285, %v283, %v280
    %v287 = vadd.f32 %v165, 1.0
    %v288 = vlog2.pop %v287
    %v289 = vmul.f32 %v288, 0.6931472
    %v290 = vmul.f32 -0.5, %v165
    %v291 = vadd.f32 %v290, 1.0
    %v292 = vmul.f32 %v291, %v165
    %v293 = vand.u32 2147483647, %v165
    %vm294 = vcmp.lt.f32.partialorder %v293, 0.0004427343
    %v295 = vsel %vm294, %v292, %v289
    %v296 = vadd.f32 %v167, 1.0
    %v297 = vlog2.pop %v296
    %v298 = vmul.f32 %v297, 0.6931472
    %v299 = vmul.f32 -0.5, %v167
    %v300 = vadd.f32 %v299, 1.0
    %v301 = vmul.f32 %v300, %v167
    %v302 = vand.u32 2147483647, %v167
    %vm303 = vcmp.lt.f32.partialorder %v302, 0.0004427343
    %v304 = vsel %vm303, %v301, %v298
    %v305 = vadd.f32 %v169, 1.0
    %v306 = vlog2.pop %v305
    %v307 = vmul.f32 %v306, 0.6931472
    %v308 = vmul.f32 -0.5, %v169
    %v309 = vadd.f32 %v308, 1.0
    %v310 = vmul.f32 %v309, %v169
    %v311 = vand.u32 2147483647, %v169
    %vm312 = vcmp.lt.f32.partialorder %v311, 0.0004427343
    %v313 = vsel %vm312, %v310, %v307
    %v314 = vsel %vm106, %v90, %v178
    %v315 = vsel %vm107, %v91, %v187
    %v316 = vsel %vm108, %v92, %v196
    %v317 = vsel %vm109, %v93, %v205
    %v318 = vsel %vm110, %v94, %v214
    %v319 = vsel %vm111, %v95, %v223
    %v320 = vsel %vm112, %v96, %v232
    %v321 = vsel %vm113, %v97, %v241
    %v322 = vsel %vm114, %v98, %v250
    %v323 = vsel %vm115, %v99, %v259
    %v324 = vsel %vm116, %v100, %v268
    %v325 = vsel %vm117, %v101, %v277
    %v326 = vsel %vm118, %v102, %v286
    %v327 = vsel %vm119, %v103, %v295
    %v328 = vsel %vm120, %v104, %v304
    %v329 = vsel %vm121, %v105, %v313
    %v330 = vld [vmem:[#allocation8] sm:$0xff]
    %v331 = vld [vmem:[#allocation8 + $0x8] sm:$0xff]
    %v332 = vld [vmem:[#allocation8 + $0x10] sm:$0xff]
    %v333 = vld [vmem:[#allocation8 + $0x18] sm:$0xff]
    %v334 = vld [vmem:[#allocation8 + $0x20] sm:$0xff]
    %v335 = vld [vmem:[#allocation8 + $0x28] sm:$0xff]
    %v336 = vld [vmem:[#allocation8 + $0x30] sm:$0xff]
    %v337 = vld [vmem:[#allocation8 + $0x38] sm:$0xff]
    %v338 = vld [vmem:[#allocation8 + $0x40] sm:$0xff]
    %v339 = vld [vmem:[#allocation8 + $0x48] sm:$0xff]
    %v340 = vld [vmem:[#allocation8 + $0x50] sm:$0xff]
    %v341 = vld [vmem:[#allocation8 + $0x58] sm:$0xff]
    %v342 = vld [vmem:[#allocation8 + $0x60] sm:$0xff]
    %v343 = vld [vmem:[#allocation8 + $0x68] sm:$0xff]
    %v344 = vld [vmem:[#allocation8 + $0x70] sm:$0xff]
    %v345 = vld [vmem:[#allocation8 + $0x78] sm:$0xff]
    %v346 = vmul.f32 %v314, %v330
    %v347 = vmul.f32 %v315, %v331
    %v348 = vmul.f32 %v316, %v332
    %v349 = vmul.f32 %v317, %v333
    %v350 = vmul.f32 %v318, %v334
    %v351 = vmul.f32 %v319, %v335
    %v352 = vmul.f32 %v320, %v336
    %v353 = vmul.f32 %v321, %v337
    %v354 = vmul.f32 %v322, %v338
    %v355 = vmul.f32 %v323, %v339
    %v356 = vmul.f32 %v324, %v340
    %v357 = vmul.f32 %v325, %v341
    %v358 = vmul.f32 %v326, %v342
    %v359 = vmul.f32 %v327, %v343
    %v360 = vmul.f32 %v328, %v344
    %v361 = vmul.f32 %v329, %v345
    %v362 = vadd.f32 %v74, %v346
    %v363 = vadd.f32 %v75, %v347
    %v364 = vadd.f32 %v76, %v348
    %v365 = vadd.f32 %v77, %v349
    %v366 = vadd.f32 %v78, %v350
    %v367 = vadd.f32 %v79, %v351
    %v368 = vadd.f32 %v80, %v352
    %v369 = vadd.f32 %v81, %v353
    %v370 = vadd.f32 %v82, %v354
    %v371 = vadd.f32 %v83, %v355
    %v372 = vadd.f32 %v84, %v356
    %v373 = vadd.f32 %v85, %v357
    %v374 = vadd.f32 %v86, %v358
    %v375 = vadd.f32 %v87, %v359
    %v376 = vadd.f32 %v88, %v360
    %v377 = vadd.f32 %v89, %v361
    %v378 = vpack.c.bf16 %v363, %v362
    %v379 = vpack.c.bf16 %v365, %v364
    %v380 = vpack.c.bf16 %v367, %v366
    %v381 = vpack.c.bf16 %v369, %v368
    %v382 = vpack.c.bf16 %v371, %v370
    %v383 = vpack.c.bf16 %v373, %v372
    %v384 = vpack.c.bf16 %v375, %v374
    %v385 = vpack.c.bf16 %v377, %v376
    %v386 = vld [vmem:[#allocation2] sm:$0xff]
    %v387 = vld [vmem:[#allocation2 + $0x8] sm:$0xff]
    %v388 = vpack.c.bf16 %v387, %v386
    %389 = vmatprep.subr.bf16.mxu0 0
    %390 = vmatpush1.bf16.xpose.msra.mxu0 %v385
    %391 = vmatprep.subr.bf16.mxu0 0
    %392 = vmatpush1.bf16.xpose.msra.mxu0 %v384
    %393 = vmatprep.subr.bf16.mxu0 0
    %394 = vmatpush1.bf16.xpose.msra.mxu0 %v383
    %395 = vmatprep.subr.bf16.mxu0 0
    %396 = vmatpush1.bf16.xpose.msra.mxu0 %v382
    %397 = vmatprep.subr.bf16.mxu0 0
    %398 = vmatpush1.bf16.xpose.msra.mxu0 %v381
    %399 = vmatprep.subr.bf16.mxu0 0
    %400 = vmatpush1.bf16.xpose.msra.mxu0 %v380
    %401 = vmatprep.subr.bf16.mxu0 0
    %402 = vmatpush1.bf16.xpose.msra.mxu0 %v379
    %403 = vmatprep.subr.bf16.mxu0 0
    %404 = vmatpush1.bf16.xpose.msra.mxu0 %v378
    %405 = vmatprep.subr.bf16.mxu0 0
    %406 = vmatpush2.bf16.xpose.msra.mxu0 0
    %407 = vmatprep.subr.bf16.mxu0 0
    %408 = vmatpush2.bf16.xpose.msra.mxu0 0
    %409 = vmatprep.subr.bf16.mxu0 0
    %410 = vmatpush2.bf16.xpose.msra.mxu0 0
    %411 = vmatprep.subr.bf16.mxu0 0
    %412 = vmatpush2.bf16.xpose.msra.mxu0 0
    %413 = vmatprep.subr.bf16.mxu0 0
    %414 = vmatpush2.bf16.xpose.msra.mxu0 0
    %415 = vmatprep.subr.bf16.mxu0 0
    %416 = vmatpush2.bf16.xpose.msra.mxu0 0
    %417 = vmatprep.subr.bf16.mxu0 0
    %418 = vmatpush2.bf16.xpose.msra.mxu0 0
    %419 = vmatprep.subr.bf16.mxu0 0
    %420 = vmatpush2.bf16.xpose.msra.mxu0 0
    %421 = vmatprep.mubr.bf16.mxu0 0
    %422 = vmatmul.mubr.bf16.gmra.mxu0 %v388
    %v423 = vpop.f32.mrf.mxu0
    %v424 = vadd.f32 0.0, %v423
    %v425 = vpop.f32.mrf.mxu0
    %v426 = vpop.f32.mrf.mxu0
    %v427 = vadd.f32 0.0, %v426
    %v428 = vpop.f32.mrf.mxu0
    %429 = vdwg.mxu0
    %430 = vst [vmem:[#allocation10] sm:$0xff] %v424
    %431 = vst [vmem:[#allocation10 + $0x8] sm:$0xff] %v427
    // Predicated region
    $region34: #{tpu_custom_call.1} parent=1 // pred_check
      _
    $region35: #{tpu_custom_call.1} parent=1 // pred_check_branch
      %433 = sbr.rel (0) target = $region37
    $region36: #{tpu_custom_call.1} parent=1 // pred_region
      %s435 = ssub.s32 256, 256
      %436 = vsyncadd [#allocation4], %s435
      %s437 = sshll.u32 [#allocation10], 4
      %s438 = int_to_ptr.vmem [resolvable:$true] %s437
      %443 = dma.vmem_to_hbm [thread:$0]  %s438, 256, %s4, [#allocation4], 128, 128, 8
    $region37: #{tpu_custom_call.1} parent=1 // pred_fallthru
      _
    // Predicated region
    $region38: #{tpu_custom_call.1} parent=1 // pred_check
      _
    $region39: #{tpu_custom_call.1} parent=1 // pred_check_branch
      %445 = sbr.rel (0) target = $region41
    $region40: #{tpu_custom_call.1} parent=1 // pred_region
      %446 = dma.done [#allocation4], 256
    $region41: #{tpu_custom_call.1} parent=1 // pred_fallthru
      _
    %447 = vsyncpa [#allocation3], 1
    %448 = vsyncpa [#allocation6], 1
    %449 = vsyncpa [#allocation9], 1
    %450 = vsyncpa [#allocation4], 1

</llo_original>
